<compile_context>
chip_gen: v6e
topology: v6e:2x2x1
jax: 0.10.0
libtpu: 0.0.40
codegen_flags: <defaults>
</compile_context>

<pallas_src>
import functools

import jax
import jax.numpy as jnp
from jax import lax
from jax.experimental import pallas as pl
from jax.experimental.pallas import tpu as pltpu


def _attention_kernel(enc_ref, hid_ref, w_ref, b_ref, ctx_ref, attn_ref, *,
                      mxu_dtype):
    # Per grid step (one batch element) every ref is a clean 2-D VMEM tile:
    #   enc_ref:  (S, 2H)     hid_ref: (T, H)
    #   w_ref:    (2H, H)     b_ref:   (1, H)
    #   ctx_ref:  (T, H)      attn_ref:(S, T)   (already the PyTorch layout)
    enc = enc_ref[...]
    hid = hid_ref[...]
    w = w_ref[...]
    bias = b_ref[...]

    if mxu_dtype is not None:                       # bf16 operands, f32 accum
        enc = enc.astype(mxu_dtype)
        w = w.astype(mxu_dtype)
        hid = hid.astype(mxu_dtype)

    # Projection: (S, 2H) @ (2H, H) + bias -> (S, H)
    proj = jnp.dot(enc, w, preferred_element_type=jnp.float32) + bias
    proj_mm = proj.astype(mxu_dtype) if mxu_dtype is not None else proj

    # Scores: contract H directly (no hidden.T materialized) -> (T, S)
    scores = lax.dot_general(hid, proj_mm, (((1,), (1,)), ((), ())),
                             preferred_element_type=jnp.float32)

    # Softmax over S (lane axis here) == PyTorch softmax(dim=1) on (B, S, T).
    m = jnp.max(scores, axis=-1, keepdims=True)     # (T, 1)
    e = jnp.exp(scores - m)                         # (T, S)
    denom = jnp.sum(e, axis=-1, keepdims=True)      # (T, 1)
    # Exact normalization: denom is only (T,1), cost is negligible, and the
    # emitted attention weights sum to 1 per row.
    weights = e / denom                             # (T, S)
    w_mm = weights.astype(mxu_dtype) if mxu_dtype is not None else weights

    # Context: (T, S) @ (S, H) -> (T, H)
    ctx = jnp.dot(w_mm, proj_mm, preferred_element_type=jnp.float32)

    ctx_ref[...] = ctx.astype(ctx_ref.dtype)
    # Write weights directly in the PyTorch (S, T) layout: one small in-kernel
    # XLU transpose instead of a full HBM round trip in the wrapper.
    attn_ref[...] = weights.T.astype(attn_ref.dtype)


def attention_forward(encoder_states, hidden, w_t, bias, *, mxu_dtype=None):
    """encoder_states: (S, B, 2H), hidden: (T, B, H), w_t: (2H, H), bias: (H,).

    Returns (context_vector (B, T, H), attention_weights (B, S, T)).
    Set mxu_dtype=jnp.bfloat16 for large, matmul-bound shapes on v5e/v6e/v7x.
    """
    S, B, H2 = encoder_states.shape
    T, _, H = hidden.shape

    # One cheap, fusible batch-major relayout so each grid step gets a
    # contiguous (S, 2H) / (T, H) tile (no padded middle-dim slicing in VMEM).
    enc_bm = jnp.transpose(encoder_states, (1, 0, 2))   # (B, S, 2H)
    hid_bm = jnp.transpose(hidden, (1, 0, 2))            # (B, T, H)
    bias2d = bias.reshape(1, H)

    kernel = functools.partial(_attention_kernel, mxu_dtype=mxu_dtype)

    flops = 2 * B * (S * H2 * H + T * H * S + T * S * H)
    bytes_accessed = 4 * (S * B * H2 + T * B * H + H2 * H + H
                          + B * T * H + B * S * T)

    ctx, attn = pl.pallas_call(
        kernel,
        grid=(B,),
        out_shape=(
            jax.ShapeDtypeStruct((B, T, H), jnp.float32),   # context_vector
            jax.ShapeDtypeStruct((B, S, T), jnp.float32),   # attention_weights
        ),
        in_specs=[
            pl.BlockSpec((pl.Squeezed(), S, H2), lambda b: (b, 0, 0)),
            pl.BlockSpec((pl.Squeezed(), T, H), lambda b: (b, 0, 0)),
            pl.BlockSpec((H2, H), lambda b: (0, 0)),   # weight: resident block
            pl.BlockSpec((1, H), lambda b: (0, 0)),    # bias:   resident block
        ],
        out_specs=(
            pl.BlockSpec((pl.Squeezed(), T, H), lambda b: (b, 0, 0)),
            pl.BlockSpec((pl.Squeezed(), S, T), lambda b: (b, 0, 0)),
        ),
        compiler_params=pltpu.CompilerParams(
            dimension_semantics=("parallel",),        # v7x: both TensorCores
            vmem_limit_bytes=32 * 1024 * 1024,        # above v5e 16 MiB default
        ),
        cost_estimate=pl.CostEstimate(
            flops=flops,
            transcendentals=B * T * S,
            bytes_accessed=bytes_accessed),
    )(enc_bm, hid_bm, w_t, bias2d)

    return ctx, attn


def reference_forward(encoder_states, hidden, w_t, bias):
    proj = jnp.einsum("sbc,ch->sbh", encoder_states, w_t) + bias    # (S, B, H)
    enc_p = jnp.transpose(proj, (1, 0, 2))                          # (B, S, H)
    hid_p = jnp.transpose(hidden, (1, 2, 0))                        # (B, H, T)
    scores = jnp.einsum("bsh,bht->bst", enc_p, hid_p)               # (B, S, T)
    weights = jax.nn.softmax(scores, axis=1)
    context = jnp.einsum("bts,bsh->bth",
                         jnp.transpose(weights, (0, 2, 1)), enc_p)  # (B, T, H)
    return context, weights


if __name__ == "__main__":
    S, B, H, T = 8, 2, 32, 1
    key = jax.random.PRNGKey(0)
    k_enc, k_hid, k_w, k_b = jax.random.split(key, 4)

    encoder_states = jax.random.normal(k_enc, (S, B, 2 * H), dtype=jnp.float32)
    hidden = jax.random.normal(k_hid, (T, B, H), dtype=jnp.float32)

    # nn.Linear(2H, H): weight (H, 2H), bias (H); kernel consumes weight.T.
    weight = jax.random.normal(k_w, (H, 2 * H), dtype=jnp.float32) * 0.1
    bias = jax.random.normal(k_b, (H,), dtype=jnp.float32) * 0.1
    w_t = weight.T                                                  # (2H, H)

    ctx, attn = attention_forward(encoder_states, hidden, w_t, bias)
    jax.block_until_ready((ctx, attn))

    ctx_ref, attn_ref = reference_forward(encoder_states, hidden, w_t, bias)
    assert ctx.shape == (B, T, H) and attn.shape == (B, S, T)
    assert jnp.allclose(ctx, ctx_ref, atol=1e-5, rtol=1e-5), "context mismatch"
    assert jnp.allclose(attn, attn_ref, atol=1e-5, rtol=1e-5), "weights mismatch"
    # Exact normalization: each softmax column sums to 1.
    assert jnp.allclose(jnp.sum(attn, axis=1), 1.0, atol=1e-5)
    print("KERNEL_OK")
</pallas_src>

<mosaic_0001>
module attributes {stable_mosaic.version = 11 : i64} {
  func.func @_attention_kernel(%arg0: i32, %arg1: memref<1x8x64xf32, #tpu.memory_space<vmem>>, %arg2: memref<1x1x32xf32, #tpu.memory_space<vmem>>, %arg3: memref<64x32xf32, #tpu.memory_space<vmem>>, %arg4: memref<1x32xf32, #tpu.memory_space<vmem>>, %arg5: memref<1x1x32xf32, #tpu.memory_space<vmem>>, %arg6: memref<1x8x1xf32, #tpu.memory_space<vmem>>) attributes {dimension_semantics = [#tpu.dimension_semantics<parallel>], iteration_bounds = array<i64: 2>, scalar_prefetch = 0 : i64, scratch_operands = 0 : i64, tpu.core_type = #tpu.core_type<tc>, window_params = [{transform_indices = @transform_0, window_bounds = array<i64: 1, 8, 64>}, {transform_indices = @transform_1, window_bounds = array<i64: 1, 1, 32>}, {pipeline_mode = #tpu.pipeline_mode<synchronous>, transform_indices = @transform_2, window_bounds = array<i64: 64, 32>}, {pipeline_mode = #tpu.pipeline_mode<synchronous>, transform_indices = @transform_3, window_bounds = array<i64: 1, 32>}, {transform_indices = @transform_4, window_bounds = array<i64: 1, 1, 32>}, {transform_indices = @transform_5, window_bounds = array<i64: 1, 8, 1>}]} {
    %c0 = arith.constant 0 : index
    %c0_0 = arith.constant 0 : index
    %c0_1 = arith.constant 0 : index
    %0 = vector.load %arg1[%c0, %c0_0, %c0_1] : memref<1x8x64xf32, #tpu.memory_space<vmem>>, vector<1x8x64xf32>
    %1 = vector.shape_cast %0 : vector<1x8x64xf32> to vector<8x64xf32>
    %c0_2 = arith.constant 0 : index
    %c0_3 = arith.constant 0 : index
    %c0_4 = arith.constant 0 : index
    %2 = vector.load %arg2[%c0_2, %c0_3, %c0_4] : memref<1x1x32xf32, #tpu.memory_space<vmem>>, vector<1x1x32xf32>
    %3 = vector.shape_cast %2 : vector<1x1x32xf32> to vector<1x32xf32>
    %c0_5 = arith.constant 0 : index
    %c0_6 = arith.constant 0 : index
    %4 = vector.load %arg3[%c0_5, %c0_6] : memref<64x32xf32, #tpu.memory_space<vmem>>, vector<64x32xf32>
    %c0_7 = arith.constant 0 : index
    %c0_8 = arith.constant 0 : index
    %5 = vector.load %arg4[%c0_7, %c0_8] : memref<1x32xf32, #tpu.memory_space<vmem>>, vector<1x32xf32>
    %cst = arith.constant dense<0.000000e+00> : vector<8x32xf32>
    %6 = tpu.matmul %1, %4, %cst {dimension_numbers = #tpu.dot_dimension_numbers<[1], [0], [0], [1], [0, 0, 1, 1], [], []>} : vector<8x64xf32>, vector<64x32xf32>, vector<8x32xf32> -> vector<8x32xf32>
    %7 = vector.broadcast %5 : vector<1x32xf32> to vector<8x32xf32>
    %8 = arith.addf %6, %7 : vector<8x32xf32>
    %cst_9 = arith.constant dense<0.000000e+00> : vector<1x8xf32>
    %9 = tpu.matmul %3, %8, %cst_9 {dimension_numbers = #tpu.dot_dimension_numbers<[1], [1], [0], [0], [0, 0, 1, 0], [], []>} : vector<1x32xf32>, vector<8x32xf32>, vector<1x8xf32> -> vector<1x8xf32>
    %cst_10 = arith.constant dense<0xFF800000> : vector<1xf32>
    %10 = vector.multi_reduction <maximumf>, %9, %cst_10 [1] : vector<1x8xf32> to vector<1xf32>
    %11 = vector.shape_cast %10 : vector<1xf32> to vector<1x1xf32>
    %12 = vector.broadcast %11 : vector<1x1xf32> to vector<1x8xf32>
    %13 = arith.subf %9, %12 : vector<1x8xf32>
    %14 = math.exp %13 : vector<1x8xf32>
    %cst_11 = arith.constant dense<0.000000e+00> : vector<1xf32>
    %15 = vector.multi_reduction <add>, %14, %cst_11 [1] : vector<1x8xf32> to vector<1xf32>
    %16 = vector.shape_cast %15 : vector<1xf32> to vector<1x1xf32>
    %17 = vector.broadcast %16 : vector<1x1xf32> to vector<1x8xf32>
    %18 = arith.divf %14, %17 : vector<1x8xf32>
    %cst_12 = arith.constant dense<0.000000e+00> : vector<1x32xf32>
    %19 = tpu.matmul %18, %8, %cst_12 {dimension_numbers = #tpu.dot_dimension_numbers<[1], [0], [0], [1], [0, 0, 1, 1], [], []>} : vector<1x8xf32>, vector<8x32xf32>, vector<1x32xf32> -> vector<1x32xf32>
    %c0_13 = arith.constant 0 : index
    %c0_14 = arith.constant 0 : index
    %c0_15 = arith.constant 0 : index
    %20 = vector.load %arg5[%c0_13, %c0_14, %c0_15] : memref<1x1x32xf32, #tpu.memory_space<vmem>>, vector<1x1x32xf32>
    %21 = vector.shape_cast %20 : vector<1x1x32xf32> to vector<1x32xf32>
    %22 = vector.shape_cast %19 : vector<1x32xf32> to vector<1x1x32xf32>
    tpu.vector_store %arg5[%c0_13, %c0_14, %c0_15], %22 {strides = array<i32>} : memref<1x1x32xf32, #tpu.memory_space<vmem>>, vector<1x1x32xf32>,
    %23 = tpu.transpose %18, [1, 0] : vector<1x8xf32> -> vector<8x1xf32>
    %c0_16 = arith.constant 0 : index
    %c0_17 = arith.constant 0 : index
    %c0_18 = arith.constant 0 : index
    %24 = vector.load %arg6[%c0_16, %c0_17, %c0_18] : memref<1x8x1xf32, #tpu.memory_space<vmem>>, vector<1x8x1xf32>
    %25 = vector.shape_cast %24 : vector<1x8x1xf32> to vector<8x1xf32>
    %26 = vector.shape_cast %23 : vector<8x1xf32> to vector<1x8x1xf32>
    tpu.vector_store %arg6[%c0_16, %c0_17, %c0_18], %26 {strides = array<i32>} : memref<1x8x1xf32, #tpu.memory_space<vmem>>, vector<1x8x1xf32>,
    return
  }
  func.func @transform_0(%arg0: i32) -> (i32, i32, i32) {
    %c0_i32 = arith.constant 0 : i32
    %c0_i32_0 = arith.constant 0 : i32
    %c0_i32_1 = arith.constant 0 : i32
    return %arg0, %c0_i32, %c0_i32_0 : i32, i32, i32
  }
  func.func @transform_1(%arg0: i32) -> (i32, i32, i32) {
    %c0_i32 = arith.constant 0 : i32
    %c0_i32_0 = arith.constant 0 : i32
    %c0_i32_1 = arith.constant 0 : i32
    return %arg0, %c0_i32, %c0_i32_0 : i32, i32, i32
  }
  func.func @transform_2(%arg0: i32) -> (i32, i32) {
    %c0_i32 = arith.constant 0 : i32
    %c0_i32_0 = arith.constant 0 : i32
    %c0_i32_1 = arith.constant 0 : i32
    return %c0_i32, %c0_i32_0 : i32, i32
  }
  func.func @transform_3(%arg0: i32) -> (i32, i32) {
    %c0_i32 = arith.constant 0 : i32
    %c0_i32_0 = arith.constant 0 : i32
    %c0_i32_1 = arith.constant 0 : i32
    return %c0_i32, %c0_i32_0 : i32, i32
  }
  func.func @transform_4(%arg0: i32) -> (i32, i32, i32) {
    %c0_i32 = arith.constant 0 : i32
    %c0_i32_0 = arith.constant 0 : i32
    %c0_i32_1 = arith.constant 0 : i32
    return %arg0, %c0_i32, %c0_i32_0 : i32, i32, i32
  }
  func.func @transform_5(%arg0: i32) -> (i32, i32, i32) {
    %c0_i32 = arith.constant 0 : i32
    %c0_i32_0 = arith.constant 0 : i32
    %c0_i32_1 = arith.constant 0 : i32
    return %arg0, %c0_i32, %c0_i32_0 : i32, i32, i32
  }
}

</mosaic_0001>

<llo_original>
// kernel: tpu_custom_call.1
$region0: #{tpu_custom_call.1}
  #allocation0 [shape = 'u32[]', space=smem, size = 0x4, offset = 0x4, fixed_abs, tag = 'smem constant byte address 0x4 - core index']
  #allocation1 [shape = 'u32[144,128]{1,0:T(1,128)}', space=vmem, size = 0x12000, scoped, tag = 'internal scratch']
  %s0 = inlined_call_operand.vmem [shape: f32[2,8,64], index: 0, kind: input, shape index: {}]
  %s1 = inlined_call_operand.vmem [shape: f32[2,1,32], index: 1, kind: input, shape index: {}]
  %s2 = inlined_call_operand.vmem [shape: f32[64,32], index: 2, kind: input, shape index: {}]
  %s3 = inlined_call_operand.vmem [shape: f32[1,32], index: 3, kind: input, shape index: {}]
  %s4 = inlined_call_operand.hbm [shape: f32[2,1,32], index: 4, kind: output, shape index: {0}]
  %s5 = inlined_call_operand.vmem [shape: f32[2,8,1], index: 5, kind: output, shape index: {1}]
  %6 = xla_tuple %s4, %s5
  %s7 = sld [smem:[#allocation0]]
  $region57: #{tpu_custom_call.1} parent=0
    _
  %s9 = ssub.s32 1, %s7
  %s10 = scalar_select 0, %s9, %s7
  $region1: #{tpu_custom_call.1} parent=0
    #allocation2 [shape = 'u8[1024]{0}', space=vmem, size = 0x400, scoped, tag = 'output window, operand 0']
    #allocation3 [shape = 's32[2]{0}', space=sflag, size = 0x8, scoped, tag = 'scoped memory for tpu_custom_call.1']
    %11 = vsyncpa [#allocation3], 0
    %s12 = scalar_lea.sflag [#allocation3], 1
    %13 = vsyncpa %s12, 0
    loop: start=0, step=1, limit=4
    $region2: #{tpu_custom_call.1} parent=1 // loop_pre_header
      _
    $region3: #{tpu_custom_call.1} parent=1 // loop_header
      %s15 = sphi 0, %s19
      %p16 = scmp.ge.s32.totalorder %s15, 4
      %s25 = sphi 0, %s27
      %s28 = sphi 0, %s25
      %s29 = sphi 0, %s28
      %s45 = sphi 0, %s29
      %s51 = sphi 0, %s53
      %s54 = sphi 0, %s51
      %s55 = sphi 0, %s54
      %s71 = sphi 0, %s55
      %s75 = sphi 0, %s75
      %s77 = sphi 0, %s75
      %s78 = sphi 0, %s77
      %s92 = sphi 0, %s78
      %s96 = sphi 0, %s96
      %s98 = sphi 0, %s96
      %s99 = sphi 0, %s98
      %s113 = sphi 0, %s99
      %s119 = sphi 0, %s121
      %s122 = sphi 0, %s119
      %s123 = sphi 0, %s122
      %s139 = sphi 0, %s123
      %s145 = sphi 0, %s147
      %s148 = sphi 0, %s145
      %s149 = sphi 0, %s148
      %s165 = sphi 0, %s149
    $region4: #{tpu_custom_call.1} parent=1 // loop_header_branch
      %18 = sbr.rel (%p16) target = $region8
    $region5: #{tpu_custom_call.1} parent=1 // loop_body
      %s20 = ssub.s32 %s15, 1
      %s21 = ssub.s32 %s15, 2
      %s22 = sadd.s32 %s15, 1
      %s23 = ssub.s32 %s15, %s22
      %p24 = scmp.eq.s32.totalorder %s23, 0
      %s26 = sadd.s32 %s25, 1
      %s27 = scalar_select %p24, %s25, %s26
      %p30 = pneg %p24
      %p31 = scmp.eq.s32.totalorder %s15, 1
      %p32 = por %p30, %p31
      %p33 = scmp.ne.s32.totalorder %s25, %s28
      %p34 = scmp.eq.s32.totalorder %s15, 0
      %p35 = por %p33, %p34
      %p36 = scmp.ne.s32.totalorder %s25, %s28
      %p37 = scmp.eq.s32.totalorder %s20, 1
      %p38 = por %p36, %p37
      %p39 = scmp.ne.s32.totalorder %s28, %s29
      %p40 = scmp.eq.s32.totalorder %s20, 0
      %p41 = por %p39, %p40
      %p42 = scmp.ne.s32.totalorder %s28, %s29
      %p43 = scmp.eq.s32.totalorder %s21, 1
      %p44 = por %p42, %p43
      %p46 = scmp.ne.s32.totalorder %s29, %s45
      %p47 = scmp.eq.s32.totalorder %s21, 0
      %p48 = por %p46, %p47
      %s49 = ssub.s32 %s15, %s22
      %p50 = scmp.eq.s32.totalorder %s49, 0
      %s52 = sadd.s32 %s51, 1
      %s53 = scalar_select %p50, %s51, %s52
      %p56 = pneg %p50
      %p57 = scmp.eq.s32.totalorder %s15, 1
      %p58 = por %p56, %p57
      %p59 = scmp.ne.s32.totalorder %s51, %s54
      %p60 = scmp.eq.s32.totalorder %s15, 0
      %p61 = por %p59, %p60
      %p62 = scmp.ne.s32.totalorder %s51, %s54
      %p63 = scmp.eq.s32.totalorder %s20, 1
      %p64 = por %p62, %p63
      %p65 = scmp.ne.s32.totalorder %s54, %s55
      %p66 = scmp.eq.s32.totalorder %s20, 0
      %p67 = por %p65, %p66
      %p68 = scmp.ne.s32.totalorder %s54, %s55
      %p69 = scmp.eq.s32.totalorder %s21, 1
      %p70 = por %p68, %p69
      %p72 = scmp.ne.s32.totalorder %s55, %s71
      %p73 = scmp.eq.s32.totalorder %s21, 0
      %p74 = por %p72, %p73
      %s76 = sadd.s32 %s75, 1
      %p79 = scmp.eq.s32.totalorder %s15, 1
      %p80 = scmp.ne.s32.totalorder %s75, %s77
      %p81 = scmp.eq.s32.totalorder %s15, 0
      %p82 = por %p80, %p81
      %p83 = scmp.ne.s32.totalorder %s75, %s77
      %p84 = scmp.eq.s32.totalorder %s20, 1
      %p85 = por %p83, %p84
      %p86 = scmp.ne.s32.totalorder %s77, %s78
      %p87 = scmp.eq.s32.totalorder %s20, 0
      %p88 = por %p86, %p87
      %p89 = scmp.ne.s32.totalorder %s77, %s78
      %p90 = scmp.eq.s32.totalorder %s21, 1
      %p91 = por %p89, %p90
      %p93 = scmp.ne.s32.totalorder %s78, %s92
      %p94 = scmp.eq.s32.totalorder %s21, 0
      %p95 = por %p93, %p94
      %s97 = sadd.s32 %s96, 1
      %p100 = scmp.eq.s32.totalorder %s15, 1
      %p101 = scmp.ne.s32.totalorder %s96, %s98
      %p102 = scmp.eq.s32.totalorder %s15, 0
      %p103 = por %p101, %p102
      %p104 = scmp.ne.s32.totalorder %s96, %s98
      %p105 = scmp.eq.s32.totalorder %s20, 1
      %p106 = por %p104, %p105
      %p107 = scmp.ne.s32.totalorder %s98, %s99
      %p108 = scmp.eq.s32.totalorder %s20, 0
      %p109 = por %p107, %p108
      %p110 = scmp.ne.s32.totalorder %s98, %s99
      %p111 = scmp.eq.s32.totalorder %s21, 1
      %p112 = por %p110, %p111
      %p114 = scmp.ne.s32.totalorder %s99, %s113
      %p115 = scmp.eq.s32.totalorder %s21, 0
      %p116 = por %p114, %p115
      %s117 = ssub.s32 %s15, %s22
      %p118 = scmp.eq.s32.totalorder %s117, 0
      %s120 = sadd.s32 %s119, 1
      %s121 = scalar_select %p118, %s119, %s120
      %p124 = pneg %p118
      %p125 = scmp.eq.s32.totalorder %s15, 1
      %p126 = por %p124, %p125
      %p127 = scmp.ne.s32.totalorder %s119, %s122
      %p128 = scmp.eq.s32.totalorder %s15, 0
      %p129 = por %p127, %p128
      %p130 = scmp.ne.s32.totalorder %s119, %s122
      %p131 = scmp.eq.s32.totalorder %s20, 1
      %p132 = por %p130, %p131
      %p133 = scmp.ne.s32.totalorder %s122, %s123
      %p134 = scmp.eq.s32.totalorder %s20, 0
      %p135 = por %p133, %p134
      %p136 = scmp.ne.s32.totalorder %s122, %s123
      %p137 = scmp.eq.s32.totalorder %s21, 1
      %p138 = por %p136, %p137
      %p140 = scmp.ne.s32.totalorder %s123, %s139
      %p141 = scmp.eq.s32.totalorder %s21, 0
      %p142 = por %p140, %p141
      %s143 = ssub.s32 %s15, %s22
      %p144 = scmp.eq.s32.totalorder %s143, 0
      %s146 = sadd.s32 %s145, 1
      %s147 = scalar_select %p144, %s145, %s146
      %p150 = pneg %p144
      %p151 = scmp.eq.s32.totalorder %s15, 1
      %p152 = por %p150, %p151
      %p153 = scmp.ne.s32.totalorder %s145, %s148
      %p154 = scmp.eq.s32.totalorder %s15, 0
      %p155 = por %p153, %p154
      %p156 = scmp.ne.s32.totalorder %s145, %s148
      %p157 = scmp.eq.s32.totalorder %s20, 1
      %p158 = por %p156, %p157
      %p159 = scmp.ne.s32.totalorder %s148, %s149
      %p160 = scmp.eq.s32.totalorder %s20, 0
      %p161 = por %p159, %p160
      %p162 = scmp.ne.s32.totalorder %s148, %s149
      %p163 = scmp.eq.s32.totalorder %s21, 1
      %p164 = por %p162, %p163
      %p166 = scmp.ne.s32.totalorder %s149, %s165
      %p167 = scmp.eq.s32.totalorder %s21, 0
      %p168 = por %p166, %p167
      %p169 = scmp.le.s32.totalorder 1, %s15
      %p170 = scmp.lt.s32.totalorder %s15, 3
      %p171 = pnand %p169, %p170
      %p172 = pneg %p171
      // Predicated region
      $region9: #{tpu_custom_call.1} parent=5 // pred_check
        _
      $region10: #{tpu_custom_call.1} parent=5 // pred_check_branch
        %174 = sbr.rel (%p171) target = $region12
      $region11: #{tpu_custom_call.1} parent=5 // pred_region
        %s175 = ssub.s32 %s15, 1
        // Predicated region
        $region13: #{tpu_custom_call.1} parent=11 // pred_check
          %p176 = pneg %p88
        $region14: #{tpu_custom_call.1} parent=11 // pred_check_branch
          %178 = sbr.rel (%p176) target = $region16
        $region15: #{tpu_custom_call.1} parent=11 // pred_region
          _
        $region16: #{tpu_custom_call.1} parent=11 // pred_fallthru
          _
        // Predicated region
        $region17: #{tpu_custom_call.1} parent=11 // pred_check
          %p179 = pneg %p109
        $region18: #{tpu_custom_call.1} parent=11 // pred_check_branch
          %181 = sbr.rel (%p179) target = $region20
        $region19: #{tpu_custom_call.1} parent=11 // pred_region
          _
        $region20: #{tpu_custom_call.1} parent=11 // pred_fallthru
          _
      $region12: #{tpu_custom_call.1} parent=5 // pred_fallthru
        _
      %p182 = scmp.lt.s32.totalorder %s15, 2
      // Predicated region
      $region21: #{tpu_custom_call.1} parent=5 // pred_check
        %p183 = pneg %p182
      $region22: #{tpu_custom_call.1} parent=5 // pred_check_branch
        %185 = sbr.rel (%p183) target = $region24
      $region23: #{tpu_custom_call.1} parent=5 // pred_region
        // Predicated region
        $region25: #{tpu_custom_call.1} parent=23 // pred_check
          %p186 = pneg %p35
        $region26: #{tpu_custom_call.1} parent=23 // pred_check_branch
          %188 = sbr.rel (%p186) target = $region28
        $region27: #{tpu_custom_call.1} parent=23 // pred_region
          %p189 = scmp.lt.s32.totalorder %s15, 1
          %s190 = scalar_select %p189, %s15, 1
          %s191 = smul.addr %s190, 8
          %s192 = scalar_lea.vmem %s0, %s191
        $region28: #{tpu_custom_call.1} parent=23 // pred_fallthru
          _
        // Predicated region
        $region29: #{tpu_custom_call.1} parent=23 // pred_check
          %p193 = pneg %p61
        $region30: #{tpu_custom_call.1} parent=23 // pred_check_branch
          %195 = sbr.rel (%p193) target = $region32
        $region31: #{tpu_custom_call.1} parent=23 // pred_region
          %p196 = scmp.lt.s32.totalorder %s15, 1
          %s197 = scalar_select %p196, %s15, 1
          %s198 = scalar_lea.vmem %s1, %s197
        $region32: #{tpu_custom_call.1} parent=23 // pred_fallthru
          _
      $region24: #{tpu_custom_call.1} parent=5 // pred_fallthru
        _
      %p199 = scmp.le.s32.totalorder 1, %s15
      %p200 = scmp.lt.s32.totalorder %s15, 3
      %p201 = pnand %p199, %p200
      %p202 = pneg %p201
      // Predicated region
      $region33: #{tpu_custom_call.1} parent=5 // pred_check
        _
      $region34: #{tpu_custom_call.1} parent=5 // pred_check_branch
        %204 = sbr.rel (%p201) target = $region36
      $region35: #{tpu_custom_call.1} parent=5 // pred_region
        %s205 = ssub.s32 %s15, 1
        %p206 = scmp.lt.s32.totalorder %s20, 1
        %s207 = scalar_select %p206, %s20, 1
        %s208 = smul.addr %s207, 8
        %s209 = scalar_lea.vmem %s0, %s208
        %p210 = pneg %p41
        %p211 = pneg %p38
        %p212 = scmp.lt.s32.totalorder %s20, 1
        %s213 = scalar_select %p212, %s20, 1
        %s214 = scalar_lea.vmem %s1, %s213
        %p215 = pneg %p67
        %p216 = pneg %p64
        %p217 = pneg %p88
        %p218 = pneg %p85
        %p219 = pneg %p109
        %p220 = pneg %p106
        %p221 = pneg %p135
        %p222 = pneg %p132
        %s223 = sand.u32 %s122, 1
        %s224 = scalar_lea.sflag [#allocation3], %s223
        %s225 = sand.u32 %s122, 1
        %s226 = scalar_lea.vmem [#allocation2], %s225
        %p227 = pneg %p161
        %p228 = pneg %p158
        %p229 = scmp.lt.s32.totalorder %s20, 1
        %s230 = scalar_select %p229, %s20, 1
        %s231 = smul.addr %s230, 8
        %s232 = scalar_lea.vmem %s5, %s231
        %p233 = scmp.lt.s32.totalorder %s20, 1
        %s234 = scalar_select %p233, %s20, 1
        %s235 = smul.addr %s234, 8
        %s236 = scalar_lea.vmem %s0, %s235
        %p237 = scmp.lt.s32.totalorder %s20, 1
        %s238 = scalar_select %p237, %s20, 1
        %s239 = scalar_lea.vmem %s1, %s238
        %p240 = scmp.lt.s32.totalorder %s20, 1
        %s241 = scalar_select %p240, %s20, 1
        %s242 = smul.addr %s241, 8
        %s243 = scalar_lea.vmem %s5, %s242
        %v244 = vld [vmem:[%s236] sm:$0xff]
        %v245 = vld [vmem:[%s239] sm:$0x1]
        %v246 = vld [vmem:[%s2] sm:$0xff]
        %v247 = vld [vmem:[%s2 + $0x8] sm:$0xff]
        %v248 = vld [vmem:[%s2 + $0x10] sm:$0xff]
        %v249 = vld [vmem:[%s2 + $0x18] sm:$0xff]
        %v250 = vld [vmem:[%s2 + $0x20] sm:$0xff]
        %v251 = vld [vmem:[%s2 + $0x28] sm:$0xff]
        %v252 = vld [vmem:[%s2 + $0x30] sm:$0xff]
        %v253 = vld [vmem:[%s2 + $0x38] sm:$0xff]
        %v254 = vld [vmem:[%s3] sm:$0x1]
        %v256 = vlaneseq
        %v257 = vshrl.u32 %v256, 7
        %v258 = vsub.s32 0, %v257
        %v259 = vrot.slane %v254, %v258
        %vm261 = vcmask 523264
        %v263 = vsel %vm261, %v244, 0
        %265 = vmatprep.subr.mxu0 0.0
        %266 = vmatpush1.msra.mxu0 0.0
        %267 = vmatprep.subr.mxu0 0.0
        %268 = vmatpush1.msra.mxu0 0.0
        %269 = vmatprep.subr.mxu0 0.0
        %270 = vmatpush1.msra.mxu0 0.0
        %271 = vmatprep.subr.mxu0 0.0
        %272 = vmatpush1.msra.mxu0 0.0
        %273 = vmatprep.subr.mxu0 0.0
        %274 = vmatpush1.msra.mxu0 0.0
        %275 = vmatprep.subr.mxu0 0.0
        %276 = vmatpush1.msra.mxu0 0.0
        %277 = vmatprep.subr.mxu0 0.0
        %278 = vmatpush1.msra.mxu0 0.0
        %279 = vmatprep.subr.mxu0 0.0
        %280 = vmatpush1.msra.mxu0 0.0
        %281 = vmatprep.subr.mxu0 0.0
        %282 = vmatpush1.msra.mxu0 %v253
        %283 = vmatprep.subr.mxu0 0.0
        %284 = vmatpush1.msra.mxu0 %v252
        %285 = vmatprep.subr.mxu0 0.0
        %286 = vmatpush1.msra.mxu0 %v251
        %287 = vmatprep.subr.mxu0 0.0
        %288 = vmatpush1.msra.mxu0 %v250
        %289 = vmatprep.subr.mxu0 0.0
        %290 = vmatpush1.msra.mxu0 %v249
        %291 = vmatprep.subr.mxu0 0.0
        %292 = vmatpush1.msra.mxu0 %v248
        %293 = vmatprep.subr.mxu0 0.0
        %294 = vmatpush1.msra.mxu0 %v247
        %295 = vmatprep.subr.mxu0 0.0
        %296 = vmatpush1.msra.mxu0 %v246
        %297 = vmatprep.subr.mxu0 0.0
        %298 = vmatpush2.msra.mxu0 0.0
        %299 = vmatprep.subr.mxu0 0.0
        %300 = vmatpush2.msra.mxu0 0.0
        %301 = vmatprep.subr.mxu0 0.0
        %302 = vmatpush2.msra.mxu0 0.0
        %303 = vmatprep.subr.mxu0 0.0
        %304 = vmatpush2.msra.mxu0 0.0
        %305 = vmatprep.subr.mxu0 0.0
        %306 = vmatpush2.msra.mxu0 0.0
        %307 = vmatprep.subr.mxu0 0.0
        %308 = vmatpush2.msra.mxu0 0.0
        %309 = vmatprep.subr.mxu0 0.0
        %310 = vmatpush2.msra.mxu0 0.0
        %311 = vmatprep.subr.mxu0 0.0
        %312 = vmatpush2.msra.mxu0 0.0
        %313 = vmatprep.subr.mxu0 0.0
        %314 = vmatpush2.msra.mxu0 0.0
        %315 = vmatprep.subr.mxu0 0.0
        %316 = vmatpush2.msra.mxu0 0.0
        %317 = vmatprep.subr.mxu0 0.0
        %318 = vmatpush2.msra.mxu0 0.0
        %319 = vmatprep.subr.mxu0 0.0
        %320 = vmatpush2.msra.mxu0 0.0
        %321 = vmatprep.subr.mxu0 0.0
        %322 = vmatpush2.msra.mxu0 0.0
        %323 = vmatprep.subr.mxu0 0.0
        %324 = vmatpush2.msra.mxu0 0.0
        %325 = vmatprep.subr.mxu0 0.0
        %326 = vmatpush2.msra.mxu0 0.0
        %327 = vmatprep.subr.mxu0 0.0
        %328 = vmatpush2.msra.mxu0 0.0
        %329 = vmatprep.mubr.f32.mxu0 0.0
        %330 = vmatmul.mubr.f32.gmra.mxu0 %v263
        %v331 = vpop.f32.mrf.mxu0
        %v332 = vadd.f32 %v259, %v331
        %v333 = vpop.f32.mrf.mxu0
        %334 = vdwg.mxu0
        %vm335 = vcmask 261120
        %v337 = vsel %vm335, %v245, 0
        %v340 = vsel %vm335, %v332, 0
        %342 = vmatprep.subr.mxu0 0.0
        %343 = vmatpush1.xpose.msra.mxu0 0.0
        %344 = vmatprep.subr.mxu0 0.0
        %345 = vmatpush1.xpose.msra.mxu0 0.0
        %346 = vmatprep.subr.mxu0 0.0
        %347 = vmatpush1.xpose.msra.mxu0 0.0
        %348 = vmatprep.subr.mxu0 0.0
        %349 = vmatpush1.xpose.msra.mxu0 0.0
        %350 = vmatprep.subr.mxu0 0.0
        %351 = vmatpush1.xpose.msra.mxu0 0.0
        %352 = vmatprep.subr.mxu0 0.0
        %353 = vmatpush1.xpose.msra.mxu0 0.0
        %354 = vmatprep.subr.mxu0 0.0
        %355 = vmatpush1.xpose.msra.mxu0 0.0
        %356 = vmatprep.subr.mxu0 0.0
        %357 = vmatpush1.xpose.msra.mxu0 0.0
        %358 = vmatprep.subr.mxu0 0.0
        %359 = vmatpush1.xpose.msra.mxu0 0.0
        %360 = vmatprep.subr.mxu0 0.0
        %361 = vmatpush1.xpose.msra.mxu0 0.0
        %362 = vmatprep.subr.mxu0 0.0
        %363 = vmatpush1.xpose.msra.mxu0 0.0
        %364 = vmatprep.subr.mxu0 0.0
        %365 = vmatpush1.xpose.msra.mxu0 0.0
        %366 = vmatprep.subr.mxu0 0.0
        %367 = vmatpush1.xpose.msra.mxu0 0.0
        %368 = vmatprep.subr.mxu0 0.0
        %369 = vmatpush1.xpose.msra.mxu0 0.0
        %370 = vmatprep.subr.mxu0 0.0
        %371 = vmatpush1.xpose.msra.mxu0 0.0
        %372 = vmatprep.subr.mxu0 0.0
        %373 = vmatpush1.xpose.msra.mxu0 %v340
        %374 = vmatprep.subr.mxu0 0.0
        %375 = vmatpush2.xpose.msra.mxu0 0.0
        %376 = vmatprep.subr.mxu0 0.0
        %377 = vmatpush2.xpose.msra.mxu0 0.0
        %378 = vmatprep.subr.mxu0 0.0
        %379 = vmatpush2.xpose.msra.mxu0 0.0
        %380 = vmatprep.subr.mxu0 0.0
        %381 = vmatpush2.xpose.msra.mxu0 0.0
        %382 = vmatprep.subr.mxu0 0.0
        %383 = vmatpush2.xpose.msra.mxu0 0.0
        %384 = vmatprep.subr.mxu0 0.0
        %385 = vmatpush2.xpose.msra.mxu0 0.0
        %386 = vmatprep.subr.mxu0 0.0
        %387 = vmatpush2.xpose.msra.mxu0 0.0
        %388 = vmatprep.subr.mxu0 0.0
        %389 = vmatpush2.xpose.msra.mxu0 0.0
        %390 = vmatprep.subr.mxu0 0.0
        %391 = vmatpush2.xpose.msra.mxu0 0.0
        %392 = vmatprep.subr.mxu0 0.0
        %393 = vmatpush2.xpose.msra.mxu0 0.0
        %394 = vmatprep.subr.mxu0 0.0
        %395 = vmatpush2.xpose.msra.mxu0 0.0
        %396 = vmatprep.subr.mxu0 0.0
        %397 = vmatpush2.xpose.msra.mxu0 0.0
        %398 = vmatprep.subr.mxu0 0.0
        %399 = vmatpush2.xpose.msra.mxu0 0.0
        %400 = vmatprep.subr.mxu0 0.0
        %401 = vmatpush2.xpose.msra.mxu0 0.0
        %402 = vmatprep.subr.mxu0 0.0
        %403 = vmatpush2.xpose.msra.mxu0 0.0
        %404 = vmatprep.subr.mxu0 0.0
        %405 = vmatpush2.xpose.msra.mxu0 0.0
        %406 = vmatprep.mubr.f32.mxu0 0.0
        %407 = vmatmul.mubr.f32.gmra.mxu0 %v337
        %v408 = vpop.f32.mrf.mxu0
        %v409 = vadd.f32 0.0, %v408
        %v410 = vpop.f32.mrf.mxu0
        %411 = vdwg.mxu0
        %vm412 = vcmask 57344
        %v413 = vsel %vm412, %v409, -inf
        %414 = vmax.xlane.f32.xlu0 %v413
        %v415 = vpop.xlane.xlu0 %414
        %v416 = vsub.f32 %v409, %v415
        %v417 = vmul.f32 %v416, 1.442695
        %v418 = vpow.pop %v417
        %v419 = vsel %vm412, %v418, 0.0
        %420 = vadd.xlane.f32.xlu0 %v419
        %v421 = vpop.xlane.xlu0 %420
        %v422 = vrcp.pop %v421
        %v423 = vmul.f32 %v418, %v422
        %vm424 = vcmask 64512
        %v426 = vsel %vm424, %v423, 0
        %428 = vmatprep.subr.mxu0 0.0
        %429 = vmatpush1.msra.mxu0 0.0
        %430 = vmatprep.subr.mxu0 0.0
        %431 = vmatpush1.msra.mxu0 0.0
        %432 = vmatprep.subr.mxu0 0.0
        %433 = vmatpush1.msra.mxu0 0.0
        %434 = vmatprep.subr.mxu0 0.0
        %435 = vmatpush1.msra.mxu0 0.0
        %436 = vmatprep.subr.mxu0 0.0
        %437 = vmatpush1.msra.mxu0 0.0
        %438 = vmatprep.subr.mxu0 0.0
        %439 = vmatpush1.msra.mxu0 0.0
        %440 = vmatprep.subr.mxu0 0.0
        %441 = vmatpush1.msra.mxu0 0.0
        %442 = vmatprep.subr.mxu0 0.0
        %443 = vmatpush1.msra.mxu0 0.0
        %444 = vmatprep.subr.mxu0 0.0
        %445 = vmatpush1.msra.mxu0 0.0
        %446 = vmatprep.subr.mxu0 0.0
        %447 = vmatpush1.msra.mxu0 0.0
        %448 = vmatprep.subr.mxu0 0.0
        %449 = vmatpush1.msra.mxu0 0.0
        %450 = vmatprep.subr.mxu0 0.0
        %451 = vmatpush1.msra.mxu0 0.0
        %452 = vmatprep.subr.mxu0 0.0
        %453 = vmatpush1.msra.mxu0 0.0
        %454 = vmatprep.subr.mxu0 0.0
        %455 = vmatpush1.msra.mxu0 0.0
        %456 = vmatprep.subr.mxu0 0.0
        %457 = vmatpush1.msra.mxu0 0.0
        %458 = vmatprep.subr.mxu0 0.0
        %459 = vmatpush1.msra.mxu0 %v332
        %460 = vmatprep.subr.mxu0 0.0
        %461 = vmatpush2.msra.mxu0 0.0
        %462 = vmatprep.subr.mxu0 0.0
        %463 = vmatpush2.msra.mxu0 0.0
        %464 = vmatprep.subr.mxu0 0.0
        %465 = vmatpush2.msra.mxu0 0.0
        %466 = vmatprep.subr.mxu0 0.0
        %467 = vmatpush2.msra.mxu0 0.0
        %468 = vmatprep.subr.mxu0 0.0
        %469 = vmatpush2.msra.mxu0 0.0
        %470 = vmatprep.subr.mxu0 0.0
        %471 = vmatpush2.msra.mxu0 0.0
        %472 = vmatprep.subr.mxu0 0.0
        %473 = vmatpush2.msra.mxu0 0.0
        %474 = vmatprep.subr.mxu0 0.0
        %475 = vmatpush2.msra.mxu0 0.0
        %476 = vmatprep.subr.mxu0 0.0
        %477 = vmatpush2.msra.mxu0 0.0
        %478 = vmatprep.subr.mxu0 0.0
        %479 = vmatpush2.msra.mxu0 0.0
        %480 = vmatprep.subr.mxu0 0.0
        %481 = vmatpush2.msra.mxu0 0.0
        %482 = vmatprep.subr.mxu0 0.0
        %483 = vmatpush2.msra.mxu0 0.0
        %484 = vmatprep.subr.mxu0 0.0
        %485 = vmatpush2.msra.mxu0 0.0
        %486 = vmatprep.subr.mxu0 0.0
        %487 = vmatpush2.msra.mxu0 0.0
        %488 = vmatprep.subr.mxu0 0.0
        %489 = vmatpush2.msra.mxu0 0.0
        %490 = vmatprep.subr.mxu0 0.0
        %491 = vmatpush2.msra.mxu0 0.0
        %492 = vmatprep.mubr.f32.mxu0 0.0
        %493 = vmatmul.mubr.f32.gmra.mxu0 %v426
        %v494 = vpop.f32.mrf.mxu0
        %v495 = vadd.f32 0.0, %v494
        %v496 = vpop.f32.mrf.mxu0
        %497 = vdwg.mxu0
        %vm498 = vcmask 253952
        %499 = vst.msk [vmem:[%s226] sm:$0x1] %vm498, %v495
        %500 = vxpose.xlu0.b32.start [1/16] %v423, 128
        %501 = vxpose.xlu0.b32.cont [2/16] 0.0, 128
        %502 = vxpose.xlu0.b32.cont [3/16] 0.0, 128
        %503 = vxpose.xlu0.b32.cont [4/16] 0.0, 128
        %504 = vxpose.xlu0.b32.cont [5/16] 0.0, 128
        %505 = vxpose.xlu0.b32.cont [6/16] 0.0, 128
        %506 = vxpose.xlu0.b32.cont [7/16] 0.0, 128
        %507 = vxpose.xlu0.b32.cont [8/16] 0.0, 128
        %508 = vxpose.xlu0.b32.cont [9/16] 0.0, 128
        %509 = vxpose.xlu0.b32.cont [10/16] 0.0, 128
        %510 = vxpose.xlu0.b32.cont [11/16] 0.0, 128
        %511 = vxpose.xlu0.b32.cont [12/16] 0.0, 128
        %512 = vxpose.xlu0.b32.cont [13/16] 0.0, 128
        %513 = vxpose.xlu0.b32.cont [14/16] 0.0, 128
        %514 = vxpose.xlu0.b32.cont [15/16] 0.0, 128
        %515 = vxpose.xlu0.b32.end [16/16] 0.0, 128
        %v516 = vpop.trf.xlu0
        %v517 = vpop.trf.xlu0
        %v518 = vpop.trf.xlu0
        %v519 = vpop.trf.xlu0
        %v520 = vpop.trf.xlu0
        %v521 = vpop.trf.xlu0
        %v522 = vpop.trf.xlu0
        %v523 = vpop.trf.xlu0
        %v524 = vpop.trf.xlu0
        %v525 = vpop.trf.xlu0
        %v526 = vpop.trf.xlu0
        %v527 = vpop.trf.xlu0
        %v528 = vpop.trf.xlu0
        %v529 = vpop.trf.xlu0
        %v530 = vpop.trf.xlu0
        %v531 = vpop.trf.xlu0
        %vm532 = vcmask 7168
        %533 = vst.msk [vmem:[%s243] sm:$0xff] %vm532, %v516
        %s534 = sand.u32 %s122, 1
        %s535 = scalar_lea.sflag [#allocation3], %s534
        %s536 = sand.u32 %s122, 1
        %s537 = scalar_lea.vmem [#allocation2], %s536
        %p538 = scmp.lt.s32.totalorder %s20, 1
        %s539 = scalar_select %p538, %s20, 1
        %s540 = smul.addr %s539, 8
        %s541 = scalar_lea.vmem %s5, %s540
        // Predicated region
        $region37: #{tpu_custom_call.1} parent=35 // pred_check
          %p542 = pneg %p132
        $region38: #{tpu_custom_call.1} parent=35 // pred_check_branch
          %544 = sbr.rel (%p542) target = $region40
        $region39: #{tpu_custom_call.1} parent=35 // pred_region
          %s546 = ssub.s32 16, 16
          %547 = vsyncadd %s535, %s546
          %s548 = smul.addr %s20, 16
          %s549 = scalar_lea.hbm %s4, %s548
          %s551 = sshll.u32 %s537, 4
          %s552 = int_to_ptr.vmem [resolvable:$true] %s551
          %554 = dma.vmem_to_hbm [thread:$0]  %s552, 16, %s549, %s535
        $region40: #{tpu_custom_call.1} parent=35 // pred_fallthru
          _
        // Predicated region
        $region41: #{tpu_custom_call.1} parent=35 // pred_check
          %p555 = pneg %p158
        $region42: #{tpu_custom_call.1} parent=35 // pred_check_branch
          %557 = sbr.rel (%p555) target = $region44
        $region43: #{tpu_custom_call.1} parent=35 // pred_region
          _
        $region44: #{tpu_custom_call.1} parent=35 // pred_fallthru
          _
      $region36: #{tpu_custom_call.1} parent=5 // pred_fallthru
        _
      %p558 = scmp.le.s32.totalorder 2, %s15
      // Predicated region
      $region45: #{tpu_custom_call.1} parent=5 // pred_check
        %p559 = pneg %p558
      $region46: #{tpu_custom_call.1} parent=5 // pred_check_branch
        %561 = sbr.rel (%p559) target = $region48
      $region47: #{tpu_custom_call.1} parent=5 // pred_region
        %s562 = ssub.s32 %s15, 2
        // Predicated region
        $region49: #{tpu_custom_call.1} parent=47 // pred_check
          %p563 = pneg %p138
        $region50: #{tpu_custom_call.1} parent=47 // pred_check_branch
          %565 = sbr.rel (%p563) target = $region52
        $region51: #{tpu_custom_call.1} parent=47 // pred_region
          %s566 = sand.u32 %s123, 1
          %s567 = scalar_lea.sflag [#allocation3], %s566
          %s568 = sand.u32 %s123, 1
          %s569 = scalar_lea.vmem [#allocation2], %s568
          %570 = dma.done %s567, 16
        $region52: #{tpu_custom_call.1} parent=47 // pred_fallthru
          _
        // Predicated region
        $region53: #{tpu_custom_call.1} parent=47 // pred_check
          %p571 = pneg %p164
        $region54: #{tpu_custom_call.1} parent=47 // pred_check_branch
          %573 = sbr.rel (%p571) target = $region56
        $region55: #{tpu_custom_call.1} parent=47 // pred_region
          %p574 = scmp.lt.s32.totalorder %s21, 1
          %s575 = scalar_select %p574, %s21, 1
          %s576 = smul.addr %s575, 8
          %s577 = scalar_lea.vmem %s5, %s576
        $region56: #{tpu_custom_call.1} parent=47 // pred_fallthru
          _
      $region48: #{tpu_custom_call.1} parent=5 // pred_fallthru
        _
    $region6: #{tpu_custom_call.1} parent=1 // loop_footer
      %s19 = sadd.s32 1, %s15
    $region7: #{tpu_custom_call.1} parent=1 // loop_footer_branch
      %14 = sbr.rel target = $region3
    $region8: #{tpu_custom_call.1} parent=1 // loop_exit
      _
    %578 = vsyncpa [#allocation3], 1
    %s579 = scalar_lea.sflag [#allocation3], 1
    %580 = vsyncpa %s579, 1

</llo_original>
